<compile_context>
chip_gen: v5e
topology: v5e:2x2
jax: 0.10.0
libtpu: 0.0.40
codegen_flags: <defaults>
</compile_context>

<pallas_src>
import functools
import math

import jax
import jax.numpy as jnp
from jax import lax
from jax.experimental import pallas as pl
from jax.experimental.pallas import tpu as pltpu

_EPS = 1e-12  # matches F.normalize(p=2) eps semantics (clamp_min on the norm)


def _arcmargin_kernel(xn_ref, w_ref, label_ref, o_ref, *,
                      tc, s, cos_m, sin_m, th, mm, easy_margin):
    # xn: (B, D) bf16 pre-normalized input (resident),
    # w:  (TC, D) bf16 raw weight tile (streamed),
    # label: (B, 1) int32, o: (B, TC) output tile.
    w = w_ref[...]                                            # (TC, D) bf16
    label = label_ref[...]                                    # (B, 1) int32

    # cosine = xn @ (w/||w||)^T with the weight row norm folded in AFTER the
    # matmul as a per-column scale.  Raw bf16 MXU matmul, f32 accumulation;
    # contracting last axes -> no weight transpose materialized.
    raw = lax.dot_general(
        xn_ref[...], w,
        dimension_numbers=(((1,), (1,)), ((), ())),
        preferred_element_type=jnp.float32)                   # (B, TC) f32

    # Per-class sum-of-squares: f32 upcast only for the squaring, reduced with a
    # ones-row matmul so the result is already in (1, TC) lane layout (no
    # cross-lane transpose of a (TC, 1) vector is ever needed).
    w2 = jnp.square(w.astype(jnp.float32))                    # (TC, D) f32
    ssq_row = lax.dot_general(
        jnp.ones((1, w2.shape[1]), jnp.float32), w2,
        dimension_numbers=(((1,), (1,)), ((), ())),
        preferred_element_type=jnp.float32)                   # (1, TC) f32
    inv_w_row = lax.rsqrt(jnp.maximum(ssq_row, _EPS * _EPS))  # (1, TC)
    cosine = raw * inv_w_row                                  # (B, TC)

    # ArcFace margin, applied only at the label column.
    b = cosine.shape[0]
    col0 = pl.program_id(0) * tc
    col_ids = col0 + lax.broadcasted_iota(jnp.int32, (b, tc), 1)
    is_target = col_ids == label                              # (B, TC)

    # Select-based gather: padding columns of a partial last weight tile may be
    # garbage/NaN but are never selected (labels < C) and are dropped on
    # writeback.  Do NOT switch to a float one-hot / multiply mask.
    cos_t = jnp.sum(jnp.where(is_target, cosine, 0.0),
                    axis=-1, keepdims=True)                   # (B, 1)
    sin_t = jnp.sqrt(jnp.maximum(1.0 - cos_t * cos_t, 0.0))   # clamped: no NaN
    phi_t = cos_t * cos_m - sin_t * sin_m
    if easy_margin:
        phi_t = jnp.where(cos_t > 0.0, phi_t, cos_t)
    else:
        phi_t = jnp.where(cos_t > th, phi_t, cos_t - mm)

    out = jnp.where(is_target, phi_t, cosine)
    o_ref[...] = (out * s).astype(o_ref.dtype)


def _vmem_capacity_bytes():
    """Physical VMEM per TensorCore; falls back to the smallest current part."""
    try:
        return int(pltpu.get_tpu_info().vmem_capacity_bytes)
    except Exception:  # non-TPU trace / older runtime
        return 64 * 1024 * 1024  # v7x per-TensorCore (conservative)


def _pick_class_tile(C, D, *, dtype_bytes=2):
    """Largest lane-aligned class tile whose bf16 weight tile fits a per-buffer
    budget chosen per generation: ~8 MiB on 128 MiB-VMEM parts (v5e/v6e), ~4 MiB
    on v7x (64 MiB per TensorCore).  The pipeline double-buffers the tile and
    the kernel keeps an f32 upcast of it, so total use is ~6-8x this budget."""
    vmem_cap = _vmem_capacity_bytes()
    if vmem_cap >= 96 * 1024 * 1024:          # v5e / v6e: 128 MiB VMEM
        weight_buf_bytes = 8 * 1024 * 1024
    else:                                     # v7x: 64 MiB per TensorCore
        weight_buf_bytes = 4 * 1024 * 1024
    tc = (weight_buf_bytes // (D * dtype_bytes)) // 128 * 128
    tc = max(128, tc)
    c_padded = ((C + 127) // 128) * 128
    return int(min(tc, c_padded))


def arc_margin_forward(x, weight, label, *, s=30.0, m=0.5, easy_margin=False,
                       class_tile=None, out_dtype=jnp.float32):
    """x: (B, in_features), weight: (out_features, in_features), label: (B,) int.
    Returns (B, out_features) in `out_dtype` (f32 default; pass bf16 to halve
    the output writeback traffic if the downstream loss can take it)."""
    B, D = x.shape
    C, D2 = weight.shape
    assert D == D2
    label2d = label.reshape(B, 1).astype(jnp.int32)

    # Hoist the cheap (B, D) input normalization out of the kernel (previously
    # recomputed every grid step to stay megacore-safe) and feed the MXU bf16.
    x32 = x.astype(jnp.float32)
    xn = x32 * lax.rsqrt(jnp.maximum(jnp.sum(x32 * x32, axis=-1, keepdims=True),
                                     _EPS * _EPS))
    xn_bf16 = xn.astype(jnp.bfloat16)

    # Stream the weights in bf16: halves the dominant HBM stream.  (Ideally the
    # parameter is stored in bf16 so this cast is a no-op.)
    w_bf16 = weight if weight.dtype == jnp.bfloat16 else weight.astype(jnp.bfloat16)

    tc = int(class_tile) if class_tile is not None else _pick_class_tile(C, D)
    assert tc % 128 == 0, "class tile must be a multiple of 128 (lane-dense)"
    n_tiles = pl.cdiv(C, tc)

    kernel = functools.partial(
        _arcmargin_kernel,
        tc=tc, s=float(s),
        cos_m=math.cos(m), sin_m=math.sin(m),
        th=math.cos(math.pi - m), mm=math.sin(math.pi - m) * m,
        easy_margin=easy_margin)

    # VMEM accounting (don't lie to the compiler): double-buffered bf16 weight
    # tile, double-buffered output tile, resident bf16 input, plus in-kernel
    # temporaries (f32 upcast + square of the weight tile, cosine/iota/mask/out).
    vmem_cap = _vmem_capacity_bytes()
    out_bytes = jnp.dtype(out_dtype).itemsize
    vmem_need = (2 * tc * D * 2            # weight tile, double-buffered (bf16)
                 + 2 * tc * D * 4          # f32 upcast + squared temporaries
                 + 2 * B * tc * out_bytes  # output tile, double-buffered
                 + 24 * B * tc             # cosine / iota / mask / pre-store temps
                 + 2 * B * D * 2           # resident normalized input (bf16)
                 + (2 << 20))              # slack
    vmem_limit = int(min(max(vmem_need, 32 * 1024 * 1024), int(0.85 * vmem_cap)))

    # TODO(synk): for large batch (B >= ~256) add a second "parallel" grid axis
    # tiling B so the MXU M-dimension is filled and the resident x tile stays bounded.
    return pl.pallas_call(
        kernel,
        out_shape=jax.ShapeDtypeStruct((B, C), out_dtype),
        grid=(n_tiles,),
        in_specs=[
            pl.BlockSpec((B, D), lambda j: (0, 0)),    # xn: stays resident
            pl.BlockSpec((tc, D), lambda j: (j, 0)),   # weight: streamed bf16 tiles
            pl.BlockSpec((B, 1), lambda j: (0, 0)),    # label
        ],
        out_specs=pl.BlockSpec((B, tc), lambda j: (0, j)),  # lane-dense (B, TC)
        compiler_params=pltpu.CompilerParams(
            dimension_semantics=("parallel",),   # v7x megacore splits the weight stream
            vmem_limit_bytes=vmem_limit),
    )(xn_bf16, w_bf16, label2d)


def _reference(x, weight, label, *, s=30.0, m=0.5, easy_margin=False):
    # Mirrors the PyTorch ArcMargin forward with the kernel's numerics:
    # bf16-rounded weights, bf16 MXU feed with f32 accumulation, norm folded as
    # a post-matmul scale, and sine clamped against NaN.
    x32 = x.astype(jnp.float32)
    xn = x32 / jnp.maximum(jnp.linalg.norm(x32, axis=-1, keepdims=True), _EPS)
    wb = weight.astype(jnp.bfloat16)
    w32 = wb.astype(jnp.float32)
    inv_w = 1.0 / jnp.maximum(jnp.linalg.norm(w32, axis=-1), _EPS)      # (C,)
    raw = jnp.dot(xn.astype(jnp.bfloat16), wb.T,
                  preferred_element_type=jnp.float32)
    cosine = raw * inv_w[None, :]
    sine = jnp.sqrt(jnp.maximum(1.0 - cosine ** 2, 0.0))
    phi = cosine * math.cos(m) - sine * math.sin(m)
    if easy_margin:
        phi = jnp.where(cosine > 0.0, phi, cosine)
    else:
        phi = jnp.where(cosine > math.cos(math.pi - m),
                        phi, cosine - math.sin(math.pi - m) * m)
    one_hot = jax.nn.one_hot(label, weight.shape[0], dtype=jnp.float32)
    return (one_hot * phi + (1.0 - one_hot) * cosine) * s


if __name__ == "__main__":
    # Small shapes consistent with the module: batch=8, in_features=256,
    # out_features=1024; class_tile=256 -> 4 grid steps to exercise streaming.
    B, IN, OUT = 8, 256, 1024
    key = jax.random.PRNGKey(0)
    kx, kw, kl = jax.random.split(key, 3)

    x = jax.random.normal(kx, (B, IN), dtype=jnp.float32)

    # Deterministic xavier_uniform_ init for weight (out_features, in_features).
    bound = math.sqrt(6.0 / (IN + OUT))
    weight = jax.random.uniform(kw, (OUT, IN), dtype=jnp.float32,
                                minval=-bound, maxval=bound)

    label = jax.random.randint(kl, (B,), 0, OUT, dtype=jnp.int32)

    out = arc_margin_forward(x, weight, label, s=30.0, m=0.5,
                             easy_margin=False, class_tile=256)
    out = jax.block_until_ready(out)

    ref = _reference(x, weight, label, s=30.0, m=0.5, easy_margin=False)
    assert out.shape == (B, OUT)
    assert jnp.allclose(out, ref, atol=5e-2, rtol=1e-3), \
        float(jnp.max(jnp.abs(out - ref)))

    print("KERNEL_OK")
</pallas_src>

<mosaic_0001>
module attributes {stable_mosaic.version = 11 : i64} {
  func.func @_arcmargin_kernel(%arg0: i32, %arg1: memref<8x256xbf16, #tpu.memory_space<vmem>>, %arg2: memref<256x256xbf16, #tpu.memory_space<vmem>>, %arg3: memref<8x1xi32, #tpu.memory_space<vmem>>, %arg4: memref<8x256xf32, #tpu.memory_space<vmem>>) attributes {dimension_semantics = [#tpu.dimension_semantics<parallel>], iteration_bounds = array<i64: 4>, scalar_prefetch = 0 : i64, scratch_operands = 0 : i64, tpu.core_type = #tpu.core_type<tc>, window_params = [{pipeline_mode = #tpu.pipeline_mode<synchronous>, transform_indices = @transform_0, window_bounds = array<i64: 8, 256>}, {transform_indices = @transform_1, window_bounds = array<i64: 256, 256>}, {pipeline_mode = #tpu.pipeline_mode<synchronous>, transform_indices = @transform_2, window_bounds = array<i64: 8, 1>}, {transform_indices = @transform_3, window_bounds = array<i64: 8, 256>}]} {
    %c0 = arith.constant 0 : index
    %c0_0 = arith.constant 0 : index
    %0 = vector.load %arg2[%c0, %c0_0] : memref<256x256xbf16, #tpu.memory_space<vmem>>, vector<256x256xbf16>
    %c0_1 = arith.constant 0 : index
    %c0_2 = arith.constant 0 : index
    %1 = vector.load %arg3[%c0_1, %c0_2] : memref<8x1xi32, #tpu.memory_space<vmem>>, vector<8x1xi32>
    %c0_3 = arith.constant 0 : index
    %c0_4 = arith.constant 0 : index
    %2 = vector.load %arg1[%c0_3, %c0_4] : memref<8x256xbf16, #tpu.memory_space<vmem>>, vector<8x256xbf16>
    %cst = arith.constant dense<0.000000e+00> : vector<8x256xf32>
    %3 = tpu.matmul %2, %0, %cst {dimension_numbers = #tpu.dot_dimension_numbers<[1], [1], [0], [0], [0, 0, 1, 0], [], []>} : vector<8x256xbf16>, vector<256x256xbf16>, vector<8x256xf32> -> vector<8x256xf32>
    %4 = arith.extf %0 : vector<256x256xbf16> to vector<256x256xf32>
    %5 = arith.mulf %4, %4 : vector<256x256xf32>
    %cst_5 = arith.constant 1.000000e+00 : f32
    %6 = vector.broadcast %cst_5 : f32 to vector<1x256xf32>
    %cst_6 = arith.constant dense<0.000000e+00> : vector<1x256xf32>
    %7 = tpu.matmul %6, %5, %cst_6 {dimension_numbers = #tpu.dot_dimension_numbers<[1], [1], [0], [0], [0, 0, 1, 0], [], []>} : vector<1x256xf32>, vector<256x256xf32>, vector<1x256xf32> -> vector<1x256xf32>
    %cst_7 = arith.constant 1.000000e-24 : f32
    %8 = vector.broadcast %cst_7 : f32 to vector<1x256xf32>
    %9 = arith.maximumf %7, %8 : vector<1x256xf32>
    %10 = math.rsqrt %9 : vector<1x256xf32>
    %11 = vector.broadcast %10 : vector<1x256xf32> to vector<8x256xf32>
    %12 = arith.mulf %3, %11 : vector<8x256xf32>
    %c256_i32 = arith.constant 256 : i32
    %13 = arith.muli %arg0, %c256_i32 : i32
    %14 = tpu.iota {dimensions = array<i32: 1>} : vector<8x256xi32>
    %15 = vector.broadcast %13 : i32 to vector<8x256xi32>
    %16 = arith.addi %15, %14 : vector<8x256xi32>
    %17 = vector.broadcast %1 : vector<8x1xi32> to vector<8x256xi32>
    %18 = arith.cmpi eq, %16, %17 : vector<8x256xi32>
    %cst_8 = arith.constant 0.000000e+00 : f32
    %19 = vector.broadcast %cst_8 : f32 to vector<8x256xf32>
    %20 = arith.select %18, %12, %19 : vector<8x256xi1>, vector<8x256xf32>
    %cst_9 = arith.constant dense<0.000000e+00> : vector<8xf32>
    %21 = vector.multi_reduction <add>, %20, %cst_9 [1] : vector<8x256xf32> to vector<8xf32>
    %22 = vector.shape_cast %21 : vector<8xf32> to vector<8x1xf32>
    %23 = arith.mulf %22, %22 : vector<8x1xf32>
    %cst_10 = arith.constant 1.000000e+00 : f32
    %24 = vector.broadcast %cst_10 : f32 to vector<8x1xf32>
    %25 = arith.subf %24, %23 : vector<8x1xf32>
    %cst_11 = arith.constant 0.000000e+00 : f32
    %26 = vector.broadcast %cst_11 : f32 to vector<8x1xf32>
    %27 = arith.maximumf %25, %26 : vector<8x1xf32>
    %28 = math.sqrt %27 : vector<8x1xf32>
    %cst_12 = arith.constant 0.87758255 : f32
    %29 = vector.broadcast %cst_12 : f32 to vector<8x1xf32>
    %30 = arith.mulf %22, %29 : vector<8x1xf32>
    %cst_13 = arith.constant 0.47942555 : f32
    %31 = vector.broadcast %cst_13 : f32 to vector<8x1xf32>
    %32 = arith.mulf %28, %31 : vector<8x1xf32>
    %33 = arith.subf %30, %32 : vector<8x1xf32>
    %cst_14 = arith.constant -0.87758255 : f32
    %34 = vector.broadcast %cst_14 : f32 to vector<8x1xf32>
    %35 = arith.cmpf ogt, %22, %34 : vector<8x1xf32>
    %cst_15 = arith.constant 0.239712775 : f32
    %36 = vector.broadcast %cst_15 : f32 to vector<8x1xf32>
    %37 = arith.subf %22, %36 : vector<8x1xf32>
    %38 = arith.select %35, %33, %37 : vector<8x1xi1>, vector<8x1xf32>
    %39 = vector.shape_cast %38 : vector<8x1xf32> to vector<8x1xf32>
    %40 = vector.broadcast %39 : vector<8x1xf32> to vector<8x256xf32>
    %41 = arith.select %18, %40, %12 : vector<8x256xi1>, vector<8x256xf32>
    %cst_16 = arith.constant 3.000000e+01 : f32
    %42 = vector.broadcast %cst_16 : f32 to vector<8x256xf32>
    %43 = arith.mulf %41, %42 : vector<8x256xf32>
    %c0_17 = arith.constant 0 : index
    %c0_18 = arith.constant 0 : index
    %44 = vector.load %arg4[%c0_17, %c0_18] : memref<8x256xf32, #tpu.memory_space<vmem>>, vector<8x256xf32>
    tpu.vector_store %arg4[%c0_17, %c0_18], %43 {strides = array<i32>} : memref<8x256xf32, #tpu.memory_space<vmem>>, vector<8x256xf32>,
    return
  }
  func.func @transform_0(%arg0: i32) -> (i32, i32) {
    %c0_i32 = arith.constant 0 : i32
    %c0_i32_0 = arith.constant 0 : i32
    %c0_i32_1 = arith.constant 0 : i32
    return %c0_i32, %c0_i32_0 : i32, i32
  }
  func.func @transform_1(%arg0: i32) -> (i32, i32) {
    %c0_i32 = arith.constant 0 : i32
    %c0_i32_0 = arith.constant 0 : i32
    return %arg0, %c0_i32 : i32, i32
  }
  func.func @transform_2(%arg0: i32) -> (i32, i32) {
    %c0_i32 = arith.constant 0 : i32
    %c0_i32_0 = arith.constant 0 : i32
    %c0_i32_1 = arith.constant 0 : i32
    return %c0_i32, %c0_i32_0 : i32, i32
  }
  func.func @transform_3(%arg0: i32) -> (i32, i32) {
    %c0_i32 = arith.constant 0 : i32
    %c0_i32_0 = arith.constant 0 : i32
    return %c0_i32, %arg0 : i32, i32
  }
}

</mosaic_0001>

<llo_original>
// kernel: tpu_custom_call.1
$region0: #{tpu_custom_call.1}
  #allocation0 [shape = 'u32[]', space=smem, size = 0x4, offset = 0x4, fixed_abs, tag = 'smem constant byte address 0x4 - core index']
  #allocation1 [shape = 'u32[72,128]{1,0:T(1,128)}', space=vmem, size = 0x9000, scoped, tag = 'internal scratch']
  %s0 = inlined_call_operand.vmem [shape: bf16[8,256], index: 0, kind: input, shape index: {}]
  %s1 = inlined_call_operand.hbm [shape: bf16[1024,256], index: 1, kind: input, shape index: {}]
  %s2 = inlined_call_operand.vmem [shape: s32[8,1], index: 2, kind: input, shape index: {}]
  %s3 = inlined_call_operand.hbm [shape: f32[8,1024], index: 3, kind: output, shape index: {}]
  %s4 = sld [smem:[#allocation0]]
  $region49: #{tpu_custom_call.1} parent=0
    _
  %s6 = ssub.s32 1, %s4
  %s7 = scalar_select 0, %s6, %s4
  $region1: #{tpu_custom_call.1} parent=0
    #allocation2 [shape = 'u8[262144]{0}', space=vmem, size = 0x40000, scoped, tag = 'input window, operand 1']
    #allocation3 [shape = 's32[2]{0}', space=sflag, size = 0x8, scoped, tag = 'scoped memory for tpu_custom_call.1']
    #allocation4 [shape = 's32[2]{0}', space=sflag, size = 0x8, scoped, tag = 'scoped memory for tpu_custom_call.1']
    #allocation5 [shape = 'u8[16384]{0}', space=vmem, size = 0x4000, scoped, tag = 'output window, operand 0']
    %8 = vsyncpa [#allocation3], 0
    %s9 = scalar_lea.sflag [#allocation3], 1
    %10 = vsyncpa %s9, 0
    %11 = vsyncpa [#allocation4], 0
    %s12 = scalar_lea.sflag [#allocation4], 1
    %13 = vsyncpa %s12, 0
    loop: start=0, step=1, limit=6
    $region2: #{tpu_custom_call.1} parent=1 // loop_pre_header
      _
    $region3: #{tpu_custom_call.1} parent=1 // loop_header
      %s15 = sphi 0, %s19
      %p16 = scmp.ge.s32.totalorder %s15, 6
      %s23 = sphi 0, %s23
      %s25 = sphi 0, %s23
      %s26 = sphi 0, %s25
      %s40 = sphi 0, %s26
      %s46 = sphi 0, %s48
      %s49 = sphi 0, %s46
      %s50 = sphi 0, %s49
      %s66 = sphi 0, %s50
      %s70 = sphi 0, %s70
      %s72 = sphi 0, %s70
      %s73 = sphi 0, %s72
      %s87 = sphi 0, %s73
      %s93 = sphi 0, %s95
      %s96 = sphi 0, %s93
      %s97 = sphi 0, %s96
      %s113 = sphi 0, %s97
    $region4: #{tpu_custom_call.1} parent=1 // loop_header_branch
      %18 = sbr.rel (%p16) target = $region8
    $region5: #{tpu_custom_call.1} parent=1 // loop_body
      %s20 = ssub.s32 %s15, 1
      %s21 = ssub.s32 %s15, 2
      %s22 = sadd.s32 %s15, 1
      %s24 = sadd.s32 %s23, 1
      %p27 = scmp.eq.s32.totalorder %s15, 3
      %p28 = scmp.ne.s32.totalorder %s23, %s25
      %p29 = scmp.eq.s32.totalorder %s15, 0
      %p30 = por %p28, %p29
      %p31 = scmp.ne.s32.totalorder %s23, %s25
      %p32 = scmp.eq.s32.totalorder %s20, 3
      %p33 = por %p31, %p32
      %p34 = scmp.ne.s32.totalorder %s25, %s26
      %p35 = scmp.eq.s32.totalorder %s20, 0
      %p36 = por %p34, %p35
      %p37 = scmp.ne.s32.totalorder %s25, %s26
      %p38 = scmp.eq.s32.totalorder %s21, 3
      %p39 = por %p37, %p38
      %p41 = scmp.ne.s32.totalorder %s26, %s40
      %p42 = scmp.eq.s32.totalorder %s21, 0
      %p43 = por %p41, %p42
      %s44 = ssub.s32 %s15, %s22
      %p45 = scmp.eq.s32.totalorder %s44, 0
      %s47 = sadd.s32 %s46, 1
      %s48 = scalar_select %p45, %s46, %s47
      %p51 = pneg %p45
      %p52 = scmp.eq.s32.totalorder %s15, 3
      %p53 = por %p51, %p52
      %p54 = scmp.ne.s32.totalorder %s46, %s49
      %p55 = scmp.eq.s32.totalorder %s15, 0
      %p56 = por %p54, %p55
      %p57 = scmp.ne.s32.totalorder %s46, %s49
      %p58 = scmp.eq.s32.totalorder %s20, 3
      %p59 = por %p57, %p58
      %p60 = scmp.ne.s32.totalorder %s49, %s50
      %p61 = scmp.eq.s32.totalorder %s20, 0
      %p62 = por %p60, %p61
      %p63 = scmp.ne.s32.totalorder %s49, %s50
      %p64 = scmp.eq.s32.totalorder %s21, 3
      %p65 = por %p63, %p64
      %p67 = scmp.ne.s32.totalorder %s50, %s66
      %p68 = scmp.eq.s32.totalorder %s21, 0
      %p69 = por %p67, %p68
      %s71 = sadd.s32 %s70, 1
      %p74 = scmp.eq.s32.totalorder %s15, 3
      %p75 = scmp.ne.s32.totalorder %s70, %s72
      %p76 = scmp.eq.s32.totalorder %s15, 0
      %p77 = por %p75, %p76
      %p78 = scmp.ne.s32.totalorder %s70, %s72
      %p79 = scmp.eq.s32.totalorder %s20, 3
      %p80 = por %p78, %p79
      %p81 = scmp.ne.s32.totalorder %s72, %s73
      %p82 = scmp.eq.s32.totalorder %s20, 0
      %p83 = por %p81, %p82
      %p84 = scmp.ne.s32.totalorder %s72, %s73
      %p85 = scmp.eq.s32.totalorder %s21, 3
      %p86 = por %p84, %p85
      %p88 = scmp.ne.s32.totalorder %s73, %s87
      %p89 = scmp.eq.s32.totalorder %s21, 0
      %p90 = por %p88, %p89
      %s91 = ssub.s32 %s15, %s22
      %p92 = scmp.eq.s32.totalorder %s91, 0
      %s94 = sadd.s32 %s93, 1
      %s95 = scalar_select %p92, %s93, %s94
      %p98 = pneg %p92
      %p99 = scmp.eq.s32.totalorder %s15, 3
      %p100 = por %p98, %p99
      %p101 = scmp.ne.s32.totalorder %s93, %s96
      %p102 = scmp.eq.s32.totalorder %s15, 0
      %p103 = por %p101, %p102
      %p104 = scmp.ne.s32.totalorder %s93, %s96
      %p105 = scmp.eq.s32.totalorder %s20, 3
      %p106 = por %p104, %p105
      %p107 = scmp.ne.s32.totalorder %s96, %s97
      %p108 = scmp.eq.s32.totalorder %s20, 0
      %p109 = por %p107, %p108
      %p110 = scmp.ne.s32.totalorder %s96, %s97
      %p111 = scmp.eq.s32.totalorder %s21, 3
      %p112 = por %p110, %p111
      %p114 = scmp.ne.s32.totalorder %s97, %s113
      %p115 = scmp.eq.s32.totalorder %s21, 0
      %p116 = por %p114, %p115
      %p117 = scmp.le.s32.totalorder 1, %s15
      %p118 = scmp.lt.s32.totalorder %s15, 5
      %p119 = pnand %p117, %p118
      %p120 = pneg %p119
      // Predicated region
      $region9: #{tpu_custom_call.1} parent=5 // pred_check
        _
      $region10: #{tpu_custom_call.1} parent=5 // pred_check_branch
        %122 = sbr.rel (%p119) target = $region12
      $region11: #{tpu_custom_call.1} parent=5 // pred_region
        %s123 = ssub.s32 %s15, 1
        // Predicated region
        $region13: #{tpu_custom_call.1} parent=11 // pred_check
          %p124 = pneg %p36
        $region14: #{tpu_custom_call.1} parent=11 // pred_check_branch
          %126 = sbr.rel (%p124) target = $region16
        $region15: #{tpu_custom_call.1} parent=11 // pred_region
          _
        $region16: #{tpu_custom_call.1} parent=11 // pred_fallthru
          _
        // Predicated region
        $region17: #{tpu_custom_call.1} parent=11 // pred_check
          %p127 = pneg %p83
        $region18: #{tpu_custom_call.1} parent=11 // pred_check_branch
          %129 = sbr.rel (%p127) target = $region20
        $region19: #{tpu_custom_call.1} parent=11 // pred_region
          _
        $region20: #{tpu_custom_call.1} parent=11 // pred_fallthru
          _
      $region12: #{tpu_custom_call.1} parent=5 // pred_fallthru
        _
      %p130 = scmp.lt.s32.totalorder %s15, 4
      // Predicated region
      $region21: #{tpu_custom_call.1} parent=5 // pred_check
        %p131 = pneg %p130
      $region22: #{tpu_custom_call.1} parent=5 // pred_check_branch
        %133 = sbr.rel (%p131) target = $region24
      $region23: #{tpu_custom_call.1} parent=5 // pred_region
        // Predicated region
        $region25: #{tpu_custom_call.1} parent=23 // pred_check
          %p134 = pneg %p56
        $region26: #{tpu_custom_call.1} parent=23 // pred_check_branch
          %136 = sbr.rel (%p134) target = $region28
        $region27: #{tpu_custom_call.1} parent=23 // pred_region
          %s137 = sand.u32 %s46, 1
          %s138 = scalar_lea.sflag [#allocation3], %s137
          %s139 = sand.u32 %s46, 1
          %s140 = smul.addr %s139, 256
          %s141 = scalar_lea.vmem [#allocation2], %s140
          %s142 = smul.u32 32, %s15
          %144 = vsyncadd %s138, 0
          %s145 = smul.addr %s142, 2
          %s146 = smul.addr %s145, 4
          %s147 = scalar_lea.hbm %s1, %s146
          %s148 = sshll.u32 %s147, 4
          %s149 = int_to_ptr.hbm [resolvable:$true] %s148
          %s150 = sshll.u32 %s141, 4
          %s151 = int_to_ptr.vmem [resolvable:$true] %s150
          %156 = dma.hbm_to_vmem [thread:$0]  %s149, 4096, %s151, %s138, 128, 128, 8
        $region28: #{tpu_custom_call.1} parent=23 // pred_fallthru
          _
      $region24: #{tpu_custom_call.1} parent=5 // pred_fallthru
        _
      %p157 = scmp.le.s32.totalorder 1, %s15
      %p158 = scmp.lt.s32.totalorder %s15, 5
      %p159 = pnand %p157, %p158
      %p160 = pneg %p159
      // Predicated region
      $region29: #{tpu_custom_call.1} parent=5 // pred_check
        _
      $region30: #{tpu_custom_call.1} parent=5 // pred_check_branch
        %162 = sbr.rel (%p159) target = $region32
      $region31: #{tpu_custom_call.1} parent=5 // pred_region
        %s163 = ssub.s32 %s15, 1
        %s164 = sand.u32 %s49, 1
        %s165 = scalar_lea.sflag [#allocation3], %s164
        %s166 = sand.u32 %s49, 1
        %s167 = smul.addr %s166, 256
        %s168 = scalar_lea.vmem [#allocation2], %s167
        // Predicated region
        $region33: #{tpu_custom_call.1} parent=31 // pred_check
          %p169 = pneg %p62
        $region34: #{tpu_custom_call.1} parent=31 // pred_check_branch
          %171 = sbr.rel (%p169) target = $region36
        $region35: #{tpu_custom_call.1} parent=31 // pred_region
          %173 = dma.done %s165, 4096
        $region36: #{tpu_custom_call.1} parent=31 // pred_fallthru
          _
        %p174 = pneg %p36
        %p175 = pneg %p33
        %s176 = sand.u32 %s49, 1
        %s177 = scalar_lea.sflag [#allocation3], %s176
        %s178 = sand.u32 %s49, 1
        %s179 = smul.addr %s178, 256
        %s180 = scalar_lea.vmem [#allocation2], %s179
        %p181 = pneg %p62
        %p182 = pneg %p59
        %p183 = pneg %p83
        %p184 = pneg %p80
        %p185 = pneg %p109
        %p186 = pneg %p106
        %s187 = sand.u32 %s96, 1
        %s188 = scalar_lea.sflag [#allocation4], %s187
        %s189 = sand.u32 %s96, 1
        %s190 = smul.addr %s189, 16
        %s191 = scalar_lea.vmem [#allocation5], %s190
        %s192 = smul.u32 32, %s20
        %s193 = smul.u32 2, %s20
        %v194 = vld [vmem:[%s168] sm:$0xff]
        %v195 = vld [vmem:[%s168 + $0x8] sm:$0xff]
        %v196 = vld [vmem:[%s168 + $0x10] sm:$0xff]
        %v197 = vld [vmem:[%s168 + $0x18] sm:$0xff]
        %v198 = vld [vmem:[%s168 + $0x20] sm:$0xff]
        %v199 = vld [vmem:[%s168 + $0x28] sm:$0xff]
        %v200 = vld [vmem:[%s168 + $0x30] sm:$0xff]
        %v201 = vld [vmem:[%s168 + $0x38] sm:$0xff]
        %v202 = vld [vmem:[%s168 + $0x40] sm:$0xff]
        %v203 = vld [vmem:[%s168 + $0x48] sm:$0xff]
        %v204 = vld [vmem:[%s168 + $0x50] sm:$0xff]
        %v205 = vld [vmem:[%s168 + $0x58] sm:$0xff]
        %v206 = vld [vmem:[%s168 + $0x60] sm:$0xff]
        %v207 = vld [vmem:[%s168 + $0x68] sm:$0xff]
        %v208 = vld [vmem:[%s168 + $0x70] sm:$0xff]
        %v209 = vld [vmem:[%s168 + $0x78] sm:$0xff]
        %v210 = vld [vmem:[%s168 + $0x80] sm:$0xff]
        %v211 = vld [vmem:[%s168 + $0x88] sm:$0xff]
        %v212 = vld [vmem:[%s168 + $0x90] sm:$0xff]
        %v213 = vld [vmem:[%s168 + $0x98] sm:$0xff]
        %v214 = vld [vmem:[%s168 + $0xa0] sm:$0xff]
        %v215 = vld [vmem:[%s168 + $0xa8] sm:$0xff]
        %v216 = vld [vmem:[%s168 + $0xb0] sm:$0xff]
        %v217 = vld [vmem:[%s168 + $0xb8] sm:$0xff]
        %v218 = vld [vmem:[%s168 + $0xc0] sm:$0xff]
        %v219 = vld [vmem:[%s168 + $0xc8] sm:$0xff]
        %v220 = vld [vmem:[%s168 + $0xd0] sm:$0xff]
        %v221 = vld [vmem:[%s168 + $0xd8] sm:$0xff]
        %v222 = vld [vmem:[%s168 + $0xe0] sm:$0xff]
        %v223 = vld [vmem:[%s168 + $0xe8] sm:$0xff]
        %v224 = vld [vmem:[%s168 + $0xf0] sm:$0xff]
        %v225 = vld [vmem:[%s168 + $0xf8] sm:$0xff]
        %v226 = vld [vmem:[%s2] sm:$0xff]
        %v227 = vld [vmem:[%s0] sm:$0xff]
        %v229 = vunpack.c.l.b16 %v227
        %v230 = vunpack.c.h.b16 %v227
        %v231 = vpack.c.b16 %v229, %v229
        %v232 = vpack.c.b16 %v230, %v230
        %v267 = vunpack.c.l.b16 %v194
        %v268 = vunpack.c.h.b16 %v194
        %v269 = vunpack.c.l.b16 %v195
        %v270 = vunpack.c.h.b16 %v195
        %v271 = vunpack.c.l.b16 %v196
        %v272 = vunpack.c.h.b16 %v196
        %v273 = vunpack.c.l.b16 %v197
        %v274 = vunpack.c.h.b16 %v197
        %v275 = vunpack.c.l.b16 %v198
        %v276 = vunpack.c.h.b16 %v198
        %v277 = vunpack.c.l.b16 %v199
        %v278 = vunpack.c.h.b16 %v199
        %v279 = vunpack.c.l.b16 %v200
        %v280 = vunpack.c.h.b16 %v200
        %v281 = vunpack.c.l.b16 %v201
        %v282 = vunpack.c.h.b16 %v201
        %v283 = vunpack.c.l.b16 %v202
        %v284 = vunpack.c.h.b16 %v202
        %v285 = vunpack.c.l.b16 %v203
        %v286 = vunpack.c.h.b16 %v203
        %v287 = vunpack.c.l.b16 %v204
        %v288 = vunpack.c.h.b16 %v204
        %v289 = vunpack.c.l.b16 %v205
        %v290 = vunpack.c.h.b16 %v205
        %v291 = vunpack.c.l.b16 %v206
        %v292 = vunpack.c.h.b16 %v206
        %v293 = vunpack.c.l.b16 %v207
        %v294 = vunpack.c.h.b16 %v207
        %v295 = vunpack.c.l.b16 %v208
        %v296 = vunpack.c.h.b16 %v208
        %v297 = vunpack.c.l.b16 %v209
        %v298 = vunpack.c.h.b16 %v209
        %v299 = vunpack.c.l.b16 %v210
        %v300 = vunpack.c.h.b16 %v210
        %v301 = vunpack.c.l.b16 %v211
        %v302 = vunpack.c.h.b16 %v211
        %v303 = vunpack.c.l.b16 %v212
        %v304 = vunpack.c.h.b16 %v212
        %v305 = vunpack.c.l.b16 %v213
        %v306 = vunpack.c.h.b16 %v213
        %v307 = vunpack.c.l.b16 %v214
        %v308 = vunpack.c.h.b16 %v214
        %v309 = vunpack.c.l.b16 %v215
        %v310 = vunpack.c.h.b16 %v215
        %v311 = vunpack.c.l.b16 %v216
        %v312 = vunpack.c.h.b16 %v216
        %v313 = vunpack.c.l.b16 %v217
        %v314 = vunpack.c.h.b16 %v217
        %v315 = vunpack.c.l.b16 %v218
        %v316 = vunpack.c.h.b16 %v218
        %v317 = vunpack.c.l.b16 %v219
        %v318 = vunpack.c.h.b16 %v219
        %v319 = vunpack.c.l.b16 %v220
        %v320 = vunpack.c.h.b16 %v220
        %v321 = vunpack.c.l.b16 %v221
        %v322 = vunpack.c.h.b16 %v221
        %v323 = vunpack.c.l.b16 %v222
        %v324 = vunpack.c.h.b16 %v222
        %v325 = vunpack.c.l.b16 %v223
        %v326 = vunpack.c.h.b16 %v223
        %v327 = vunpack.c.l.b16 %v224
        %v328 = vunpack.c.h.b16 %v224
        %v329 = vunpack.c.l.b16 %v225
        %v330 = vunpack.c.h.b16 %v225
        %v331 = vpack.c.b16 %v269, %v267
        %v332 = vpack.c.b16 %v270, %v268
        %v333 = vpack.c.b16 %v273, %v271
        %v334 = vpack.c.b16 %v274, %v272
        %v335 = vpack.c.b16 %v277, %v275
        %v336 = vpack.c.b16 %v278, %v276
        %v337 = vpack.c.b16 %v281, %v279
        %v338 = vpack.c.b16 %v282, %v280
        %v339 = vpack.c.b16 %v285, %v283
        %v340 = vpack.c.b16 %v286, %v284
        %v341 = vpack.c.b16 %v289, %v287
        %v342 = vpack.c.b16 %v290, %v288
        %v343 = vpack.c.b16 %v293, %v291
        %v344 = vpack.c.b16 %v294, %v292
        %v345 = vpack.c.b16 %v297, %v295
        %v346 = vpack.c.b16 %v298, %v296
        %v347 = vpack.c.b16 %v301, %v299
        %v348 = vpack.c.b16 %v302, %v300
        %v349 = vpack.c.b16 %v305, %v303
        %v350 = vpack.c.b16 %v306, %v304
        %v351 = vpack.c.b16 %v309, %v307
        %v352 = vpack.c.b16 %v310, %v308
        %v353 = vpack.c.b16 %v313, %v311
        %v354 = vpack.c.b16 %v314, %v312
        %v355 = vpack.c.b16 %v317, %v315
        %v356 = vpack.c.b16 %v318, %v316
        %v357 = vpack.c.b16 %v321, %v319
        %v358 = vpack.c.b16 %v322, %v320
        %v359 = vpack.c.b16 %v325, %v323
        %v360 = vpack.c.b16 %v326, %v324
        %v361 = vpack.c.b16 %v329, %v327
        %v362 = vpack.c.b16 %v330, %v328
        %395 = vmatpush.bf16.xpose.msra.mxu0 %v345
        %396 = vmatpush.bf16.xpose.msra.mxu0 %v343
        %397 = vmatpush.bf16.xpose.msra.mxu0 %v341
        %398 = vmatpush.bf16.xpose.msra.mxu0 %v339
        %399 = vmatpush.bf16.xpose.msra.mxu0 %v337
        %400 = vmatpush.bf16.xpose.msra.mxu0 %v335
        %401 = vmatpush.bf16.xpose.msra.mxu0 %v333
        %402 = vmatpush.bf16.xpose.msra.mxu0 %v331
        %403 = vmatmul.bf16.gmra.mxu0 %v231
        %v404 = vpop.f32.mrf.mxu0
        %v405 = vadd.f32 0.0, %v404
        %v406 = vpop.f32.mrf.mxu0
        %407 = vdwg.mxu0
        %408 = vmatpush.bf16.xpose.msra.mxu0 %v346
        %409 = vmatpush.bf16.xpose.msra.mxu0 %v344
        %410 = vmatpush.bf16.xpose.msra.mxu0 %v342
        %411 = vmatpush.bf16.xpose.msra.mxu0 %v340
        %412 = vmatpush.bf16.xpose.msra.mxu0 %v338
        %413 = vmatpush.bf16.xpose.msra.mxu0 %v336
        %414 = vmatpush.bf16.xpose.msra.mxu0 %v334
        %415 = vmatpush.bf16.xpose.msra.mxu0 %v332
        %416 = vmatmul.bf16.gmra.mxu0 %v232
        %v417 = vpop.f32.mrf.mxu0
        %v418 = vadd.f32 %v405, %v417
        %v419 = vpop.f32.mrf.mxu0
        %420 = vdwg.mxu0
        %421 = vmatpush.bf16.xpose.msra.mxu0 %v361
        %422 = vmatpush.bf16.xpose.msra.mxu0 %v359
        %423 = vmatpush.bf16.xpose.msra.mxu0 %v357
        %424 = vmatpush.bf16.xpose.msra.mxu0 %v355
        %425 = vmatpush.bf16.xpose.msra.mxu0 %v353
        %426 = vmatpush.bf16.xpose.msra.mxu0 %v351
        %427 = vmatpush.bf16.xpose.msra.mxu0 %v349
        %428 = vmatpush.bf16.xpose.msra.mxu0 %v347
        %429 = vmatmul.bf16.gmra.mxu0 %v231
        %v430 = vpop.f32.mrf.mxu0
        %v431 = vadd.f32 0.0, %v430
        %v432 = vpop.f32.mrf.mxu0
        %433 = vdwg.mxu0
        %434 = vmatpush.bf16.xpose.msra.mxu0 %v362
        %435 = vmatpush.bf16.xpose.msra.mxu0 %v360
        %436 = vmatpush.bf16.xpose.msra.mxu0 %v358
        %437 = vmatpush.bf16.xpose.msra.mxu0 %v356
        %438 = vmatpush.bf16.xpose.msra.mxu0 %v354
        %439 = vmatpush.bf16.xpose.msra.mxu0 %v352
        %440 = vmatpush.bf16.xpose.msra.mxu0 %v350
        %441 = vmatpush.bf16.xpose.msra.mxu0 %v348
        %442 = vmatmul.bf16.gmra.mxu0 %v232
        %v443 = vpop.f32.mrf.mxu0
        %v444 = vadd.f32 %v431, %v443
        %v445 = vpop.f32.mrf.mxu0
        %446 = vdwg.mxu0
        %v447 = vunpack.c.l.bf16 %v194
        %v448 = vunpack.c.h.bf16 %v194
        %v449 = vunpack.c.l.bf16 %v195
        %v450 = vunpack.c.h.bf16 %v195
        %v451 = vunpack.c.l.bf16 %v196
        %v452 = vunpack.c.h.bf16 %v196
        %v453 = vunpack.c.l.bf16 %v197
        %v454 = vunpack.c.h.bf16 %v197
        %v455 = vunpack.c.l.bf16 %v198
        %v456 = vunpack.c.h.bf16 %v198
        %v457 = vunpack.c.l.bf16 %v199
        %v458 = vunpack.c.h.bf16 %v199
        %v459 = vunpack.c.l.bf16 %v200
        %v460 = vunpack.c.h.bf16 %v200
        %v461 = vunpack.c.l.bf16 %v201
        %v462 = vunpack.c.h.bf16 %v201
        %v463 = vunpack.c.l.bf16 %v202
        %v464 = vunpack.c.h.bf16 %v202
        %v465 = vunpack.c.l.bf16 %v203
        %v466 = vunpack.c.h.bf16 %v203
        %v467 = vunpack.c.l.bf16 %v204
        %v468 = vunpack.c.h.bf16 %v204
        %v469 = vunpack.c.l.bf16 %v205
        %v470 = vunpack.c.h.bf16 %v205
        %v471 = vunpack.c.l.bf16 %v206
        %v472 = vunpack.c.h.bf16 %v206
        %v473 = vunpack.c.l.bf16 %v207
        %v474 = vunpack.c.h.bf16 %v207
        %v475 = vunpack.c.l.bf16 %v208
        %v476 = vunpack.c.h.bf16 %v208
        %v477 = vunpack.c.l.bf16 %v209
        %v478 = vunpack.c.h.bf16 %v209
        %v479 = vunpack.c.l.bf16 %v210
        %v480 = vunpack.c.h.bf16 %v210
        %v481 = vunpack.c.l.bf16 %v211
        %v482 = vunpack.c.h.bf16 %v211
        %v483 = vunpack.c.l.bf16 %v212
        %v484 = vunpack.c.h.bf16 %v212
        %v485 = vunpack.c.l.bf16 %v213
        %v486 = vunpack.c.h.bf16 %v213
        %v487 = vunpack.c.l.bf16 %v214
        %v488 = vunpack.c.h.bf16 %v214
        %v489 = vunpack.c.l.bf16 %v215
        %v490 = vunpack.c.h.bf16 %v215
        %v491 = vunpack.c.l.bf16 %v216
        %v492 = vunpack.c.h.bf16 %v216
        %v493 = vunpack.c.l.bf16 %v217
        %v494 = vunpack.c.h.bf16 %v217
        %v495 = vunpack.c.l.bf16 %v218
        %v496 = vunpack.c.h.bf16 %v218
        %v497 = vunpack.c.l.bf16 %v219
        %v498 = vunpack.c.h.bf16 %v219
        %v499 = vunpack.c.l.bf16 %v220
        %v500 = vunpack.c.h.bf16 %v220
        %v501 = vunpack.c.l.bf16 %v221
        %v502 = vunpack.c.h.bf16 %v221
        %v503 = vunpack.c.l.bf16 %v222
        %v504 = vunpack.c.h.bf16 %v222
        %v505 = vunpack.c.l.bf16 %v223
        %v506 = vunpack.c.h.bf16 %v223
        %v507 = vunpack.c.l.bf16 %v224
        %v508 = vunpack.c.h.bf16 %v224
        %v509 = vunpack.c.l.bf16 %v225
        %v510 = vunpack.c.h.bf16 %v225
        %v511 = vmul.f32 %v447, %v447
        %v512 = vmul.f32 %v448, %v448
        %v513 = vmul.f32 %v449, %v449
        %v514 = vmul.f32 %v450, %v450
        %v515 = vmul.f32 %v451, %v451
        %v516 = vmul.f32 %v452, %v452
        %v517 = vmul.f32 %v453, %v453
        %v518 = vmul.f32 %v454, %v454
        %v519 = vmul.f32 %v455, %v455
        %v520 = vmul.f32 %v456, %v456
        %v521 = vmul.f32 %v457, %v457
        %v522 = vmul.f32 %v458, %v458
        %v523 = vmul.f32 %v459, %v459
        %v524 = vmul.f32 %v460, %v460
        %v525 = vmul.f32 %v461, %v461
        %v526 = vmul.f32 %v462, %v462
        %v527 = vmul.f32 %v463, %v463
        %v528 = vmul.f32 %v464, %v464
        %v529 = vmul.f32 %v465, %v465
        %v530 = vmul.f32 %v466, %v466
        %v531 = vmul.f32 %v467, %v467
        %v532 = vmul.f32 %v468, %v468
        %v533 = vmul.f32 %v469, %v469
        %v534 = vmul.f32 %v470, %v470
        %v535 = vmul.f32 %v471, %v471
        %v536 = vmul.f32 %v472, %v472
        %v537 = vmul.f32 %v473, %v473
        %v538 = vmul.f32 %v474, %v474
        %v539 = vmul.f32 %v475, %v475
        %v540 = vmul.f32 %v476, %v476
        %v541 = vmul.f32 %v477, %v477
        %v542 = vmul.f32 %v478, %v478
        %v543 = vmul.f32 %v479, %v479
        %v544 = vmul.f32 %v480, %v480
        %v545 = vmul.f32 %v481, %v481
        %v546 = vmul.f32 %v482, %v482
        %v547 = vmul.f32 %v483, %v483
        %v548 = vmul.f32 %v484, %v484
        %v549 = vmul.f32 %v485, %v485
        %v550 = vmul.f32 %v486, %v486
        %v551 = vmul.f32 %v487, %v487
        %v552 = vmul.f32 %v488, %v488
        %v553 = vmul.f32 %v489, %v489
        %v554 = vmul.f32 %v490, %v490
        %v555 = vmul.f32 %v491, %v491
        %v556 = vmul.f32 %v492, %v492
        %v557 = vmul.f32 %v493, %v493
        %v558 = vmul.f32 %v494, %v494
        %v559 = vmul.f32 %v495, %v495
        %v560 = vmul.f32 %v496, %v496
        %v561 = vmul.f32 %v497, %v497
        %v562 = vmul.f32 %v498, %v498
        %v563 = vmul.f32 %v499, %v499
        %v564 = vmul.f32 %v500, %v500
        %v565 = vmul.f32 %v501, %v501
        %v566 = vmul.f32 %v502, %v502
        %v567 = vmul.f32 %v503, %v503
        %v568 = vmul.f32 %v504, %v504
        %v569 = vmul.f32 %v505, %v505
        %v570 = vmul.f32 %v506, %v506
        %v571 = vmul.f32 %v507, %v507
        %v572 = vmul.f32 %v508, %v508
        %v573 = vmul.f32 %v509, %v509
        %v574 = vmul.f32 %v510, %v510
        %575 = vmatpush.xpose.msra.mxu0 %v541
        %576 = vmatpush.xpose.msra.mxu0 %v539
        %577 = vmatpush.xpose.msra.mxu0 %v537
        %578 = vmatpush.xpose.msra.mxu0 %v535
        %579 = vmatpush.xpose.msra.mxu0 %v533
        %580 = vmatpush.xpose.msra.mxu0 %v531
        %581 = vmatpush.xpose.msra.mxu0 %v529
        %582 = vmatpush.xpose.msra.mxu0 %v527
        %583 = vmatpush.xpose.msra.mxu0 %v525
        %584 = vmatpush.xpose.msra.mxu0 %v523
        %585 = vmatpush.xpose.msra.mxu0 %v521
        %586 = vmatpush.xpose.msra.mxu0 %v519
        %587 = vmatpush.xpose.msra.mxu0 %v517
        %588 = vmatpush.xpose.msra.mxu0 %v515
        %589 = vmatpush.xpose.msra.mxu0 %v513
        %590 = vmatpush.xpose.msra.mxu0 %v511
        %591 = vmatmul.f32.gmra.mxu0 1.0
        %v592 = vpop.f32.mrf.mxu0
        %v593 = vadd.f32 0.0, %v592
        %594 = vdwg.mxu0
        %595 = vmatpush.xpose.msra.mxu0 %v542
        %596 = vmatpush.xpose.msra.mxu0 %v540
        %597 = vmatpush.xpose.msra.mxu0 %v538
        %598 = vmatpush.xpose.msra.mxu0 %v536
        %599 = vmatpush.xpose.msra.mxu0 %v534
        %600 = vmatpush.xpose.msra.mxu0 %v532
        %601 = vmatpush.xpose.msra.mxu0 %v530
        %602 = vmatpush.xpose.msra.mxu0 %v528
        %603 = vmatpush.xpose.msra.mxu0 %v526
        %604 = vmatpush.xpose.msra.mxu0 %v524
        %605 = vmatpush.xpose.msra.mxu0 %v522
        %606 = vmatpush.xpose.msra.mxu0 %v520
        %607 = vmatpush.xpose.msra.mxu0 %v518
        %608 = vmatpush.xpose.msra.mxu0 %v516
        %609 = vmatpush.xpose.msra.mxu0 %v514
        %610 = vmatpush.xpose.msra.mxu0 %v512
        %611 = vmatmul.f32.gmra.mxu0 1.0
        %v612 = vpop.f32.mrf.mxu0
        %v613 = vadd.f32 %v593, %v612
        %614 = vdwg.mxu0
        %615 = vmatpush.xpose.msra.mxu0 %v573
        %616 = vmatpush.xpose.msra.mxu0 %v571
        %617 = vmatpush.xpose.msra.mxu0 %v569
        %618 = vmatpush.xpose.msra.mxu0 %v567
        %619 = vmatpush.xpose.msra.mxu0 %v565
        %620 = vmatpush.xpose.msra.mxu0 %v563
        %621 = vmatpush.xpose.msra.mxu0 %v561
        %622 = vmatpush.xpose.msra.mxu0 %v559
        %623 = vmatpush.xpose.msra.mxu0 %v557
        %624 = vmatpush.xpose.msra.mxu0 %v555
        %625 = vmatpush.xpose.msra.mxu0 %v553
        %626 = vmatpush.xpose.msra.mxu0 %v551
        %627 = vmatpush.xpose.msra.mxu0 %v549
        %628 = vmatpush.xpose.msra.mxu0 %v547
        %629 = vmatpush.xpose.msra.mxu0 %v545
        %630 = vmatpush.xpose.msra.mxu0 %v543
        %631 = vmatmul.f32.gmra.mxu0 1.0
        %v632 = vpop.f32.mrf.mxu0
        %v633 = vadd.f32 0.0, %v632
        %634 = vdwg.mxu0
        %635 = vmatpush.xpose.msra.mxu0 %v574
        %636 = vmatpush.xpose.msra.mxu0 %v572
        %637 = vmatpush.xpose.msra.mxu0 %v570
        %638 = vmatpush.xpose.msra.mxu0 %v568
        %639 = vmatpush.xpose.msra.mxu0 %v566
        %640 = vmatpush.xpose.msra.mxu0 %v564
        %641 = vmatpush.xpose.msra.mxu0 %v562
        %642 = vmatpush.xpose.msra.mxu0 %v560
        %643 = vmatpush.xpose.msra.mxu0 %v558
        %644 = vmatpush.xpose.msra.mxu0 %v556
        %645 = vmatpush.xpose.msra.mxu0 %v554
        %646 = vmatpush.xpose.msra.mxu0 %v552
        %647 = vmatpush.xpose.msra.mxu0 %v550
        %648 = vmatpush.xpose.msra.mxu0 %v548
        %649 = vmatpush.xpose.msra.mxu0 %v546
        %650 = vmatpush.xpose.msra.mxu0 %v544
        %651 = vmatmul.f32.gmra.mxu0 1.0
        %v652 = vpop.f32.mrf.mxu0
        %v653 = vadd.f32 %v633, %v652
        %654 = vdwg.mxu0
        %v655 = vmax.f32 %v613, 1e-24
        %v656 = vmax.f32 %v653, 1e-24
        %v657 = vrsqrt.pop %v655
        %v658 = vmul.f32 %v657, %v655
        %v659 = vmul.f32 %v658, %v657
        %v660 = vmul.f32 0.5, %v659
        %v661 = vsub.f32 1.5, %v660
        %v662 = vmul.f32 %v657, %v661
        %vm663 = vweird.f32 %v655
        %vm664 = vweird.f32 %v657
        %vm665 = vmor %vm663, %vm664
        %v666 = vsel %vm665, %v657, %v662
        %v667 = vrsqrt.pop %v656
        %v668 = vmul.f32 %v667, %v656
        %v669 = vmul.f32 %v668, %v667
        %v670 = vmul.f32 0.5, %v669
        %v671 = vsub.f32 1.5, %v670
        %v672 = vmul.f32 %v667, %v671
        %vm673 = vweird.f32 %v656
        %vm674 = vweird.f32 %v667
        %vm675 = vmor %vm673, %vm674
        %v676 = vsel %vm675, %v667, %v672
        %v677 = vperm.slane %v666, 0
        %v678 = vperm.slane %v676, 0
        %v679 = vmul.f32 %v418, %v677
        %v680 = vmul.f32 %v444, %v678
        %s681 = smul.u32 %s20, 256
        %v682 = vlaneseq
        %v683 = vand.u32 %v682, 127
        %v684 = vadd.s32 %v683, 128
        %v685 = vstv %s681
        %v686 = vadd.s32 %v685, %v683
        %v687 = vadd.s32 %v685, %v684
        %688 = vset.pattern.permute.xlu0 0
        %689 = vperm.xlu0 %688, %v226
        %v690 = vpop.permute.xlu0 %689
        %vm691 = vcmp.eq.s32.totalorder %v686, %v690
        %vm692 = vcmp.eq.s32.totalorder %v687, %v690
        %v693 = vsel %vm691, %v679, 0.0
        %v694 = vsel %vm692, %v680, 0.0
        %v695 = vadd.f32 %v693, %v694
        %696 = vadd.xlane.f32.xlu0 %v695
        %v697 = vpop.xlane.xlu0 %696
        %v698 = vmul.f32 %v697, %v697
        %v699 = vsub.f32 1.0, %v698
        %v700 = vmax.f32 %v699, 0.0
        %v701 = vrsqrt.pop %v700
        %v702 = vmul.f32 %v701, %v700
        %v703 = vmul.f32 %v702, %v701
        %v704 = vmul.f32 0.5, %v703
        %v705 = vsub.f32 1.5, %v704
        %v706 = vmul.f32 %v701, %v705
        %v707 = vmul.f32 %v700, %v706
        %vm708 = vcmp.eq.f32.partialorder %v700, inf
        %v709 = vsel %vm708, %v700, %v707
        %vm710 = vcmp.eq.f32.partialorder %v700, 0.0
        %v711 = vand.u32 %v700, 2147483648
        %v712 = vsel %vm710, %v711, %v709
        %v713 = vmul.f32 %v697, 0.87758255
        %v714 = vmul.f32 %v712, 0.47942555
        %v715 = vsub.f32 %v713, %v714
        %vm716 = vcmp.gt.f32.partialorder %v697, -0.87758255
        %v717 = vsub.f32 %v697, 0.23971277
        %v718 = vsel %vm716, %v715, %v717
        %v719 = vsel %vm691, %v718, %v679
        %v720 = vsel %vm692, %v718, %v680
        %v721 = vmul.f32 %v719, 30.0
        %v722 = vmul.f32 %v720, 30.0
        %723 = vst [vmem:[%s191] sm:$0xff] %v721
        %724 = vst [vmem:[%s191 + $0x8] sm:$0xff] %v722
        %s725 = sand.u32 %s96, 1
        %s726 = scalar_lea.sflag [#allocation4], %s725
        %s727 = sand.u32 %s96, 1
        %s728 = smul.addr %s727, 16
        %s729 = scalar_lea.vmem [#allocation5], %s728
        // Predicated region
        $region37: #{tpu_custom_call.1} parent=31 // pred_check
          %p730 = pneg %p106
        $region38: #{tpu_custom_call.1} parent=31 // pred_check_branch
          %732 = sbr.rel (%p730) target = $region40
        $region39: #{tpu_custom_call.1} parent=31 // pred_region
          %s733 = smul.u32 2, %s20
          %735 = vsyncadd %s726, 0
          %s736 = smul.addr %s733, 8
          %s737 = scalar_lea.hbm %s3, %s736
          %s739 = sshll.u32 %s729, 4
          %s740 = int_to_ptr.vmem [resolvable:$true] %s739
          %s741 = sshll.u32 %s737, 4
          %s742 = int_to_ptr.hbm [resolvable:$true] %s741
          %744 = dma.vmem_to_hbm [thread:$0]  %s740, 256, %s742, %s726
        $region40: #{tpu_custom_call.1} parent=31 // pred_fallthru
          _
      $region32: #{tpu_custom_call.1} parent=5 // pred_fallthru
        _
      %p745 = scmp.le.s32.totalorder 2, %s15
      // Predicated region
      $region41: #{tpu_custom_call.1} parent=5 // pred_check
        %p746 = pneg %p745
      $region42: #{tpu_custom_call.1} parent=5 // pred_check_branch
        %748 = sbr.rel (%p746) target = $region44
      $region43: #{tpu_custom_call.1} parent=5 // pred_region
        %s749 = ssub.s32 %s15, 2
        // Predicated region
        $region45: #{tpu_custom_call.1} parent=43 // pred_check
          %p750 = pneg %p112
        $region46: #{tpu_custom_call.1} parent=43 // pred_check_branch
          %752 = sbr.rel (%p750) target = $region48
        $region47: #{tpu_custom_call.1} parent=43 // pred_region
          %s753 = sand.u32 %s97, 1
          %s754 = scalar_lea.sflag [#allocation4], %s753
          %s755 = sand.u32 %s97, 1
          %s756 = smul.addr %s755, 16
          %s757 = scalar_lea.vmem [#allocation5], %s756
          %759 = dma.done %s754, 256
        $region48: #{tpu_custom_call.1} parent=43 // pred_fallthru
          _
      $region44: #{tpu_custom_call.1} parent=5 // pred_fallthru
        _
    $region6: #{tpu_custom_call.1} parent=1 // loop_footer
      %s19 = sadd.s32 1, %s15
    $region7: #{tpu_custom_call.1} parent=1 // loop_footer_branch
      %14 = sbr.rel target = $region3
    $region8: #{tpu_custom_call.1} parent=1 // loop_exit
      _
    %760 = vsyncpa [#allocation3], 1
    %s761 = scalar_lea.sflag [#allocation3], 1
    %762 = vsyncpa %s761, 1
    %763 = vsyncpa [#allocation4], 1
    %s764 = scalar_lea.sflag [#allocation4], 1
    %765 = vsyncpa %s764, 1

</llo_original>
